<compile_context>
chip_gen: v5e
topology: v5e:2x2
jax: 0.10.0
libtpu: 0.0.40
codegen_flags: <defaults>
</compile_context>

<pallas_src>
import functools

import jax
import jax.numpy as jnp
from jax.experimental import pallas as pl
from jax.experimental.pallas import tpu as pltpu


def _round_up(x, m):
    return (x + m - 1) // m * m


def _patch_embed_kernel(x_ref, w_ref, bgb_ref, o_ref, *, d_true, eps):
    # x_ref:   (tm, K)   patch rows (true K, no padding)
    # w_ref:   (K, Dp)   projection weight, zero-padded along D
    # bgb_ref: (3, Dp)   [conv bias; LN gamma; LN beta] (f32, zero past d_true)
    # o_ref:   (tm, Dp)
    y = jnp.dot(x_ref[...], w_ref[...], preferred_element_type=jnp.float32)
    y = y + bgb_ref[0:1, :]

    dp = y.shape[-1]
    inv_d = 1.0 / d_true

    # LayerNorm over the TRUE embed dim.  Padded columns of y are exactly zero
    # (zero weight columns + zero bias), so they contribute nothing to the
    # mean; divide by the true D.  Two-pass variance for accuracy; mask the
    # padded columns of (y - mean) before squaring so they stay zero.
    mean = jnp.sum(y, axis=-1, keepdims=True) * inv_d
    yc = y - mean
    if dp > d_true:
        col = jax.lax.broadcasted_iota(jnp.int32, y.shape, 1)
        yc = jnp.where(col < d_true, yc, 0.0)
    var = jnp.sum(yc * yc, axis=-1, keepdims=True) * inv_d
    y_norm = yc * jax.lax.rsqrt(var + eps)

    # gamma/beta are zero in padded columns -> padded output columns are zero
    # (and are sliced off by the wrapper when Dp != D).
    o_ref[...] = (y_norm * bgb_ref[1:2, :] + bgb_ref[2:3, :]).astype(o_ref.dtype)


def patch_embed(x_nchw, conv_w, conv_b, ln_g, ln_b, patch_size, *,
                tm=512, use_bf16=True, out_dtype=None, eps=1e-5):
    """x_nchw: (B, C, H, W); conv_w: (D, C, ph, pw); conv_b/ln_g/ln_b: (D,).

    Returns (out, (Hp, Wp)) with out of shape (B, Hp*Wp, D), matching the
    PyTorch PatchEmbed forward.
    """
    B, C, H, W = x_nchw.shape
    ph, pw = patch_size
    D = conv_w.shape[0]
    assert H % ph == 0 and W % pw == 0, "img_size must be divisible by patch_size"
    Hp, Wp = H // ph, W // pw
    N = Hp * Wp
    K = C * ph * pw
    M = B * N
    out_dtype = x_nchw.dtype if out_dtype is None else out_dtype
    in_dtype = jnp.bfloat16 if use_bf16 else x_nchw.dtype

    # Patchify: (B,C,Hp,ph,Wp,pw) -> (B,Hp,Wp,C,ph,pw) -> (M, K).  No padding
    # of the activation; allow_input_fusion below lets XLA fuse this producer
    # into the pallas_call operand instead of materializing it in HBM.
    patches = x_nchw.reshape(B, C, Hp, ph, Wp, pw)
    patches = patches.transpose(0, 2, 4, 1, 3, 5).reshape(M, K).astype(in_dtype)

    # Conv weight (D, C, ph, pw) -> (K, D); pad only the grid-invariant
    # operands along D so output stores are lane-dense.  Dp -> 256 for small D
    # (v6e/v7x MXU is 256 wide); for typical D >= 256 multiples of 128, Dp == D
    # and the post-kernel reshape is free.
    lane = 256 if D < 256 else 128
    Dp = _round_up(D, lane)
    w = jnp.pad(conv_w.reshape(D, K).T.astype(in_dtype), ((0, 0), (0, Dp - D)))
    bgb = jnp.stack([
        jnp.pad(conv_b.astype(jnp.float32), (0, Dp - D)),
        jnp.pad(ln_g.astype(jnp.float32), (0, Dp - D)),
        jnp.pad(ln_b.astype(jnp.float32), (0, Dp - D)),
    ])  # (3, Dp)

    # Row tile: large enough to amortize per-grid-step pipeline overhead on
    # v6e/v7x, clamped for tiny problems; keep >= 2 grid steps when there is
    # enough work so both v7x TensorCores get a share under "parallel".
    tm = max(8, min(tm, _round_up(M, 8)))
    if M > 256 and pl.cdiv(M, tm) < 2:
        tm = _round_up(pl.cdiv(M, 2), 8)
    grid = (pl.cdiv(M, tm),)

    # VMEM budget: actual tile footprint (double-buffered streaming tiles +
    # resident operands + f32 LN temporaries) plus headroom; well below v7x's
    # 64 MiB, never pinned to the physical maximum.
    in_b = jnp.dtype(in_dtype).itemsize
    out_b = jnp.dtype(out_dtype).itemsize
    vmem_est = (2 * tm * K * in_b          # input tile (double-buffered)
                + 2 * K * Dp * in_b        # weight (grid-invariant)
                + 2 * 3 * Dp * 4           # bias / gamma / beta stack
                + 2 * tm * Dp * out_b      # output tile (double-buffered)
                + 3 * tm * Dp * 4)         # f32 LN temporaries
    vmem_limit = int(max(vmem_est + (8 << 20), 16 << 20))

    out = pl.pallas_call(
        functools.partial(_patch_embed_kernel, d_true=D, eps=eps),
        out_shape=jax.ShapeDtypeStruct((M, Dp), out_dtype),
        grid_spec=pltpu.PrefetchScalarGridSpec(
            num_scalar_prefetch=0,
            grid=grid,
            in_specs=[
                pl.BlockSpec((tm, K), lambda i: (i, 0)),   # last dim == full K
                pl.BlockSpec((K, Dp), lambda i: (0, 0)),
                pl.BlockSpec((3, Dp), lambda i: (0, 0)),
            ],
            out_specs=pl.BlockSpec((tm, Dp), lambda i: (i, 0)),
        ),
        compiler_params=pltpu.CompilerParams(
            dimension_semantics=("parallel",),
            vmem_limit_bytes=vmem_limit,
            allow_input_fusion=[True, False, False],
        ),
    )(patches, w, bgb)

    out = out.reshape(B, N, Dp)
    if Dp != D:
        out = out[..., :D]
    return out, (Hp, Wp)


def _reference(x_nchw, conv_w, conv_b, ln_g, ln_b, patch_size, eps=1e-5):
    """Plain-JAX reference matching PyTorch semantics (full f32 precision)."""
    ph, pw = patch_size
    y = jax.lax.conv_general_dilated(
        x_nchw, conv_w, window_strides=(ph, pw), padding="VALID",
        dimension_numbers=("NCHW", "OIHW", "NCHW"),
        precision=jax.lax.Precision.HIGHEST)
    y = y + conv_b.reshape(1, -1, 1, 1)
    B, D, Hp, Wp = y.shape
    y = y.reshape(B, D, Hp * Wp).transpose(0, 2, 1)   # flatten(2).transpose(1,2)
    mean = jnp.mean(y, axis=-1, keepdims=True)
    var = jnp.mean((y - mean) ** 2, axis=-1, keepdims=True)
    y = (y - mean) / jnp.sqrt(var + eps)
    y = y * ln_g + ln_b
    return y, (Hp, Wp)


if __name__ == "__main__":
    # Small shapes consistent with the module: img 16x16, patch 4, in_chans 3,
    # embed_dim 32.  Exercises the D padding and partial-tile paths
    # (K=48, D=32 -> Dp=256, M=32).
    B, C, H, W = 2, 3, 16, 16
    patch_size = (4, 4)
    D = 32

    key = jax.random.PRNGKey(0)
    kx, kw, kb = jax.random.split(key, 3)
    x = jax.random.normal(kx, (B, C, H, W), dtype=jnp.float32)
    conv_w = jax.random.normal(kw, (D, C, *patch_size), dtype=jnp.float32) * 0.05
    conv_b = jax.random.normal(kb, (D,), dtype=jnp.float32) * 0.02
    ln_g = jnp.ones((D,), dtype=jnp.float32)   # nn.LayerNorm default init
    ln_b = jnp.zeros((D,), dtype=jnp.float32)

    ref, (Hr, Wr) = _reference(x, conv_w, conv_b, ln_g, ln_b, patch_size)

    # Default path: bf16 operands, f32 accumulation / LayerNorm math.
    out, (Hp, Wp) = patch_embed(x, conv_w, conv_b, ln_g, ln_b, patch_size)
    out = jax.block_until_ready(out)
    assert (Hp, Wp) == (Hr, Wr) == (H // patch_size[0], W // patch_size[1])
    assert out.shape == (B, Hp * Wp, D)
    assert bool(jnp.all(jnp.isfinite(out)))
    assert jnp.allclose(out, ref, atol=5e-2, rtol=5e-2)

    # Full-f32 path: tighter check against the f32 reference.
    out_f32, _ = patch_embed(x, conv_w, conv_b, ln_g, ln_b, patch_size,
                             use_bf16=False)
    out_f32 = jax.block_until_ready(out_f32)
    assert jnp.allclose(out_f32, ref, atol=5e-3, rtol=5e-3)

    print("KERNEL_OK")
</pallas_src>

<mosaic_0001>
module attributes {stable_mosaic.version = 11 : i64} {
  func.func @_patch_embed_kernel(%arg0: i32, %arg1: memref<32x48xbf16, #tpu.memory_space<vmem>>, %arg2: memref<48x256xbf16, #tpu.memory_space<vmem>>, %arg3: memref<3x256xf32, #tpu.memory_space<vmem>>, %arg4: memref<32x256xf32, #tpu.memory_space<vmem>>) attributes {dimension_semantics = [#tpu.dimension_semantics<parallel>], iteration_bounds = array<i64: 1>, scalar_prefetch = 0 : i64, scratch_operands = 0 : i64, tpu.core_type = #tpu.core_type<tc>, window_params = [{transform_indices = @transform_0, window_bounds = array<i64: 32, 48>}, {pipeline_mode = #tpu.pipeline_mode<synchronous>, transform_indices = @transform_1, window_bounds = array<i64: 48, 256>}, {pipeline_mode = #tpu.pipeline_mode<synchronous>, transform_indices = @transform_2, window_bounds = array<i64: 3, 256>}, {transform_indices = @transform_3, window_bounds = array<i64: 32, 256>}]} {
    %c0 = arith.constant 0 : index
    %c0_0 = arith.constant 0 : index
    %0 = vector.load %arg1[%c0, %c0_0] : memref<32x48xbf16, #tpu.memory_space<vmem>>, vector<32x48xbf16>
    %c0_1 = arith.constant 0 : index
    %c0_2 = arith.constant 0 : index
    %1 = vector.load %arg2[%c0_1, %c0_2] : memref<48x256xbf16, #tpu.memory_space<vmem>>, vector<48x256xbf16>
    %cst = arith.constant dense<0.000000e+00> : vector<32x256xf32>
    %2 = tpu.matmul %0, %1, %cst {dimension_numbers = #tpu.dot_dimension_numbers<[1], [0], [0], [1], [0, 0, 1, 1], [], []>} : vector<32x48xbf16>, vector<48x256xbf16>, vector<32x256xf32> -> vector<32x256xf32>
    %c0_3 = arith.constant 0 : index
    %c0_4 = arith.constant 0 : index
    %3 = vector.load %arg3[%c0_3, %c0_4] : memref<3x256xf32, #tpu.memory_space<vmem>>, vector<1x256xf32>
    %4 = vector.broadcast %3 : vector<1x256xf32> to vector<32x256xf32>
    %5 = arith.addf %2, %4 : vector<32x256xf32>
    %cst_5 = arith.constant dense<0.000000e+00> : vector<32xf32>
    %6 = vector.multi_reduction <add>, %5, %cst_5 [1] : vector<32x256xf32> to vector<32xf32>
    %7 = vector.shape_cast %6 : vector<32xf32> to vector<32x1xf32>
    %cst_6 = arith.constant 3.125000e-02 : f32
    %8 = vector.broadcast %cst_6 : f32 to vector<32x1xf32>
    %9 = arith.mulf %7, %8 : vector<32x1xf32>
    %10 = vector.broadcast %9 : vector<32x1xf32> to vector<32x256xf32>
    %11 = arith.subf %5, %10 : vector<32x256xf32>
    %12 = tpu.iota {dimensions = array<i32: 1>} : vector<32x256xi32>
    %c32_i32 = arith.constant 32 : i32
    %13 = vector.broadcast %c32_i32 : i32 to vector<32x256xi32>
    %14 = arith.cmpi slt, %12, %13 : vector<32x256xi32>
    %cst_7 = arith.constant 0.000000e+00 : f32
    %15 = vector.broadcast %cst_7 : f32 to vector<32x256xf32>
    %16 = arith.select %14, %11, %15 : vector<32x256xi1>, vector<32x256xf32>
    %17 = arith.mulf %16, %16 : vector<32x256xf32>
    %cst_8 = arith.constant dense<0.000000e+00> : vector<32xf32>
    %18 = vector.multi_reduction <add>, %17, %cst_8 [1] : vector<32x256xf32> to vector<32xf32>
    %19 = vector.shape_cast %18 : vector<32xf32> to vector<32x1xf32>
    %cst_9 = arith.constant 3.125000e-02 : f32
    %20 = vector.broadcast %cst_9 : f32 to vector<32x1xf32>
    %21 = arith.mulf %19, %20 : vector<32x1xf32>
    %cst_10 = arith.constant 9.99999974E-6 : f32
    %22 = vector.broadcast %cst_10 : f32 to vector<32x1xf32>
    %23 = arith.addf %21, %22 : vector<32x1xf32>
    %24 = math.rsqrt %23 : vector<32x1xf32>
    %25 = vector.broadcast %24 : vector<32x1xf32> to vector<32x256xf32>
    %26 = arith.mulf %16, %25 : vector<32x256xf32>
    %c1 = arith.constant 1 : index
    %c0_11 = arith.constant 0 : index
    %27 = vector.load %arg3[%c1, %c0_11] : memref<3x256xf32, #tpu.memory_space<vmem>>, vector<1x256xf32>
    %28 = vector.broadcast %27 : vector<1x256xf32> to vector<32x256xf32>
    %29 = arith.mulf %26, %28 : vector<32x256xf32>
    %c2 = arith.constant 2 : index
    %c0_12 = arith.constant 0 : index
    %30 = vector.load %arg3[%c2, %c0_12] : memref<3x256xf32, #tpu.memory_space<vmem>>, vector<1x256xf32>
    %31 = vector.broadcast %30 : vector<1x256xf32> to vector<32x256xf32>
    %32 = arith.addf %29, %31 : vector<32x256xf32>
    %c0_13 = arith.constant 0 : index
    %c0_14 = arith.constant 0 : index
    %33 = vector.load %arg4[%c0_13, %c0_14] : memref<32x256xf32, #tpu.memory_space<vmem>>, vector<32x256xf32>
    tpu.vector_store %arg4[%c0_13, %c0_14], %32 {strides = array<i32>} : memref<32x256xf32, #tpu.memory_space<vmem>>, vector<32x256xf32>,
    return
  }
  func.func @transform_0(%arg0: i32) -> (i32, i32) {
    %c0_i32 = arith.constant 0 : i32
    %c0_i32_0 = arith.constant 0 : i32
    return %arg0, %c0_i32 : i32, i32
  }
  func.func @transform_1(%arg0: i32) -> (i32, i32) {
    %c0_i32 = arith.constant 0 : i32
    %c0_i32_0 = arith.constant 0 : i32
    %c0_i32_1 = arith.constant 0 : i32
    return %c0_i32, %c0_i32_0 : i32, i32
  }
  func.func @transform_2(%arg0: i32) -> (i32, i32) {
    %c0_i32 = arith.constant 0 : i32
    %c0_i32_0 = arith.constant 0 : i32
    %c0_i32_1 = arith.constant 0 : i32
    return %c0_i32, %c0_i32_0 : i32, i32
  }
  func.func @transform_3(%arg0: i32) -> (i32, i32) {
    %c0_i32 = arith.constant 0 : i32
    %c0_i32_0 = arith.constant 0 : i32
    return %arg0, %c0_i32 : i32, i32
  }
}

</mosaic_0001>

<llo_original>
// kernel: tpu_custom_call.1
$region0: #{tpu_custom_call.1}
  #allocation0 [shape = 'u32[]', space=smem, size = 0x4, offset = 0x4, fixed_abs, tag = 'smem constant byte address 0x4 - core index']
  #allocation1 [shape = 'u32[72,128]{1,0:T(1,128)}', space=vmem, size = 0x9000, scoped, tag = 'internal scratch']
  %s0 = inlined_call_operand.hbm [shape: bf16[32,48], index: 0, kind: input, shape index: {}]
  %s1 = inlined_call_operand.hbm [shape: bf16[48,256], index: 1, kind: input, shape index: {}]
  %s2 = inlined_call_operand.hbm [shape: f32[3,256], index: 2, kind: input, shape index: {}]
  %s3 = inlined_call_operand.hbm [shape: f32[32,256], index: 3, kind: output, shape index: {}]
  %s4 = sld [smem:[#allocation0]]
  $region34: #{tpu_custom_call.1} parent=0
    _
  %s6 = ssub.s32 1, %s4
  %s7 = scalar_select 0, %s6, %s4
  $region1: #{tpu_custom_call.1} parent=0
    #allocation2 [shape = 'u8[8192]{0}', space=vmem, size = 0x2000, scoped, tag = 'input window, operand 0, single buffered']
    #allocation3 [shape = 's32[1]{0}', space=sflag, size = 0x4, scoped, tag = 'scoped memory for tpu_custom_call.1']
    #allocation4 [shape = 's32[1]{0}', space=sflag, size = 0x4, scoped, tag = 'scoped memory for tpu_custom_call.1']
    #allocation5 [shape = 'u8[24576]{0}', space=vmem, size = 0x6000, scoped, tag = 'input window, operand 1, single buffered']
    #allocation6 [shape = 's32[1]{0}', space=sflag, size = 0x4, scoped, tag = 'scoped memory for tpu_custom_call.1']
    #allocation7 [shape = 'u8[4096]{0}', space=vmem, size = 0x1000, scoped, tag = 'input window, operand 2, single buffered']
    #allocation8 [shape = 'u8[32768]{0}', space=vmem, size = 0x8000, scoped, tag = 'output window, operand 0, single buffered']
    %8 = vsyncpa [#allocation3], 0
    %9 = vsyncpa [#allocation6], 0
    %10 = vsyncpa [#allocation4], 0
    // Predicated region
    $region2: #{tpu_custom_call.1} parent=1 // pred_check
      _
    $region3: #{tpu_custom_call.1} parent=1 // pred_check_branch
      %12 = sbr.rel (0) target = $region5
    $region4: #{tpu_custom_call.1} parent=1 // pred_region
      %14 = vsyncadd [#allocation3], 0
      %s15 = sshll.u32 %s0, 4
      %s16 = int_to_ptr.hbm [resolvable:$true] %s15
      %s17 = sshll.u32 [#allocation2], 4
      %s18 = int_to_ptr.vmem [resolvable:$true] %s17
      %23 = dma.hbm_to_vmem [thread:$0]  %s16, 256, %s18, [#allocation3], 64, 64, 4
    $region5: #{tpu_custom_call.1} parent=1 // pred_fallthru
      _
    // Predicated region
    $region6: #{tpu_custom_call.1} parent=1 // pred_check
      _
    $region7: #{tpu_custom_call.1} parent=1 // pred_check_branch
      %25 = sbr.rel (0) target = $region9
    $region8: #{tpu_custom_call.1} parent=1 // pred_region
      %27 = vsyncadd [#allocation6], 0
      %s28 = sshll.u32 %s1, 4
      %s29 = int_to_ptr.hbm [resolvable:$true] %s28
      %s30 = sshll.u32 [#allocation5], 4
      %s31 = int_to_ptr.vmem [resolvable:$true] %s30
      %36 = dma.hbm_to_vmem [thread:$0]  %s29, 768, %s31, [#allocation6], 128, 128, 8
    $region9: #{tpu_custom_call.1} parent=1 // pred_fallthru
      _
    // Predicated region
    $region10: #{tpu_custom_call.1} parent=1 // pred_check
      _
    $region11: #{tpu_custom_call.1} parent=1 // pred_check_branch
      %38 = sbr.rel (0) target = $region13
    $region12: #{tpu_custom_call.1} parent=1 // pred_region
      %40 = vsyncadd [#allocation6], 0
      %s42 = sshll.u32 %s2, 4
      %s43 = int_to_ptr.hbm [resolvable:$true] %s42
      %s44 = sshll.u32 [#allocation7], 4
      %s45 = int_to_ptr.vmem [resolvable:$true] %s44
      %47 = dma.hbm_to_vmem [thread:$0]  %s43, 128, %s45, [#allocation6]
    $region13: #{tpu_custom_call.1} parent=1 // pred_fallthru
      _
    // Predicated region
    $region14: #{tpu_custom_call.1} parent=1 // pred_check
      _
    $region15: #{tpu_custom_call.1} parent=1 // pred_check_branch
      %49 = sbr.rel (0) target = $region17
    $region16: #{tpu_custom_call.1} parent=1 // pred_region
      %51 = dma.done [#allocation3], 256
    $region17: #{tpu_custom_call.1} parent=1 // pred_fallthru
      _
    // Predicated region
    $region18: #{tpu_custom_call.1} parent=1 // pred_check
      _
    $region19: #{tpu_custom_call.1} parent=1 // pred_check_branch
      %53 = sbr.rel (0) target = $region21
    $region20: #{tpu_custom_call.1} parent=1 // pred_region
      %55 = dma.done [#allocation6], 768
    $region21: #{tpu_custom_call.1} parent=1 // pred_fallthru
      _
    // Predicated region
    $region22: #{tpu_custom_call.1} parent=1 // pred_check
      _
    $region23: #{tpu_custom_call.1} parent=1 // pred_check_branch
      %57 = sbr.rel (0) target = $region25
    $region24: #{tpu_custom_call.1} parent=1 // pred_region
      %59 = dma.done [#allocation6], 128
    $region25: #{tpu_custom_call.1} parent=1 // pred_fallthru
      _
    %v61 = vld [vmem:[#allocation2] sm:$0xf]
    %v62 = vld [vmem:[#allocation2 + $0x4] sm:$0xf]
    %v63 = vld [vmem:[#allocation2 + $0x8] sm:$0xf]
    %v64 = vld [vmem:[#allocation2 + $0xc] sm:$0xf]
    %v65 = vld [vmem:[#allocation5] sm:$0xff]
    %v66 = vld [vmem:[#allocation5 + $0x8] sm:$0xff]
    %v67 = vld [vmem:[#allocation5 + $0x10] sm:$0xff]
    %v68 = vld [vmem:[#allocation5 + $0x18] sm:$0xff]
    %v69 = vld [vmem:[#allocation5 + $0x20] sm:$0xff]
    %v70 = vld [vmem:[#allocation5 + $0x28] sm:$0xff]
    %v71 = vld [vmem:[#allocation7] ss:$4 sm:$0x3]
    %v73 = vperm.slane %v71, 0
    %v74 = vperm.slane %v71, 1
    %v81 = vunpack.c.l.b16 %v61
    %v82 = vunpack.c.l.b16 %v62
    %v83 = vunpack.c.l.b16 %v63
    %v84 = vunpack.c.l.b16 %v64
    %v85 = vpack.c.b16 %v82, %v81
    %v86 = vpack.c.b16 %v84, %v83
    %v93 = vunpack.c.l.b16 %v65
    %v94 = vunpack.c.h.b16 %v65
    %v95 = vunpack.c.l.b16 %v66
    %v96 = vunpack.c.h.b16 %v66
    %v97 = vunpack.c.l.b16 %v67
    %v98 = vunpack.c.h.b16 %v67
    %v99 = vunpack.c.l.b16 %v68
    %v100 = vunpack.c.h.b16 %v68
    %v101 = vunpack.c.l.b16 %v69
    %v102 = vunpack.c.h.b16 %v69
    %v103 = vunpack.c.l.b16 %v70
    %v104 = vunpack.c.h.b16 %v70
    %v105 = vpack.c.b16 %v95, %v93
    %v106 = vpack.c.b16 %v96, %v94
    %v107 = vpack.c.b16 %v99, %v97
    %v108 = vpack.c.b16 %v100, %v98
    %v109 = vpack.c.b16 %v103, %v101
    %v110 = vpack.c.b16 %v104, %v102
    %vm117 = vcmask 392192
    %v119 = vsel %vm117, %v85, 0
    %v122 = vsel %vm117, %v86, 0
    %124 = vmatpush.bf16.msra.mxu0 0
    %125 = vmatpush.bf16.msra.mxu0 0
    %126 = vmatpush.bf16.msra.mxu0 0
    %127 = vmatpush.bf16.msra.mxu0 0
    %128 = vmatpush.bf16.msra.mxu0 0
    %129 = vmatpush.bf16.msra.mxu0 %v109
    %130 = vmatpush.bf16.msra.mxu0 %v107
    %131 = vmatpush.bf16.msra.mxu0 %v105
    %132 = vmatmul.bf16.gmra.mxu0 %v119
    %v133 = vpop.f32.mrf.mxu0
    %v134 = vadd.f32 %v73, %v133
    %v135 = vpop.f32.mrf.mxu0
    %v136 = vadd.f32 %v73, %v135
    %137 = vmatmul.bf16.gmra.mxu0 %v122
    %v138 = vpop.f32.mrf.mxu0
    %v139 = vadd.f32 %v73, %v138
    %v140 = vpop.f32.mrf.mxu0
    %v141 = vadd.f32 %v73, %v140
    %142 = vdwg.mxu0
    %143 = vmatpush.bf16.msra.mxu0 0
    %144 = vmatpush.bf16.msra.mxu0 0
    %145 = vmatpush.bf16.msra.mxu0 0
    %146 = vmatpush.bf16.msra.mxu0 0
    %147 = vmatpush.bf16.msra.mxu0 0
    %148 = vmatpush.bf16.msra.mxu0 %v110
    %149 = vmatpush.bf16.msra.mxu0 %v108
    %150 = vmatpush.bf16.msra.mxu0 %v106
    %151 = vmatmul.bf16.gmra.mxu0 %v119
    %v152 = vpop.f32.mrf.mxu0
    %v153 = vadd.f32 %v74, %v152
    %v154 = vpop.f32.mrf.mxu0
    %v155 = vadd.f32 %v74, %v154
    %156 = vmatmul.bf16.gmra.mxu0 %v122
    %v157 = vpop.f32.mrf.mxu0
    %v158 = vadd.f32 %v74, %v157
    %v159 = vpop.f32.mrf.mxu0
    %v160 = vadd.f32 %v74, %v159
    %161 = vdwg.mxu0
    %v162 = vadd.f32 %v134, %v153
    %163 = vadd.xlane.f32.xlu0 %v162
    %v164 = vpop.xlane.xlu0 %163
    %v165 = vadd.f32 %v136, %v155
    %166 = vadd.xlane.f32.xlu0 %v165
    %v167 = vpop.xlane.xlu0 %166
    %v168 = vadd.f32 %v139, %v158
    %169 = vadd.xlane.f32.xlu0 %v168
    %v170 = vpop.xlane.xlu0 %169
    %v171 = vadd.f32 %v141, %v160
    %172 = vadd.xlane.f32.xlu0 %v171
    %v173 = vpop.xlane.xlu0 %172
    %v174 = vmul.f32 %v164, 0.03125
    %v175 = vmul.f32 %v167, 0.03125
    %v176 = vmul.f32 %v170, 0.03125
    %v177 = vmul.f32 %v173, 0.03125
    %v178 = vsub.f32 %v134, %v174
    %v179 = vsub.f32 %v153, %v174
    %v180 = vsub.f32 %v136, %v175
    %v181 = vsub.f32 %v155, %v175
    %v182 = vsub.f32 %v139, %v176
    %v183 = vsub.f32 %v158, %v176
    %v184 = vsub.f32 %v141, %v177
    %v185 = vsub.f32 %v160, %v177
    %v186 = vlaneseq
    %v187 = vand.u32 %v186, 127
    %v188 = vadd.s32 %v187, 128
    %vm189 = vcmp.lt.s32.totalorder %v187, 32
    %vm190 = vcmp.lt.s32.totalorder %v188, 32
    %v191 = vsel %vm189, %v178, 0.0
    %v192 = vsel %vm190, %v179, 0.0
    %v193 = vsel %vm189, %v180, 0.0
    %v194 = vsel %vm190, %v181, 0.0
    %v195 = vsel %vm189, %v182, 0.0
    %v196 = vsel %vm190, %v183, 0.0
    %v197 = vsel %vm189, %v184, 0.0
    %v198 = vsel %vm190, %v185, 0.0
    %v199 = vmul.f32 %v191, %v191
    %v200 = vmul.f32 %v192, %v192
    %v201 = vmul.f32 %v193, %v193
    %v202 = vmul.f32 %v194, %v194
    %v203 = vmul.f32 %v195, %v195
    %v204 = vmul.f32 %v196, %v196
    %v205 = vmul.f32 %v197, %v197
    %v206 = vmul.f32 %v198, %v198
    %v207 = vadd.f32 %v199, %v200
    %208 = vadd.xlane.f32.xlu0 %v207
    %v209 = vpop.xlane.xlu0 %208
    %v210 = vadd.f32 %v201, %v202
    %211 = vadd.xlane.f32.xlu0 %v210
    %v212 = vpop.xlane.xlu0 %211
    %v213 = vadd.f32 %v203, %v204
    %214 = vadd.xlane.f32.xlu0 %v213
    %v215 = vpop.xlane.xlu0 %214
    %v216 = vadd.f32 %v205, %v206
    %217 = vadd.xlane.f32.xlu0 %v216
    %v218 = vpop.xlane.xlu0 %217
    %v219 = vmul.f32 %v209, 0.03125
    %v220 = vmul.f32 %v212, 0.03125
    %v221 = vmul.f32 %v215, 0.03125
    %v222 = vmul.f32 %v218, 0.03125
    %v223 = vadd.f32 %v219, 1e-05
    %v224 = vadd.f32 %v220, 1e-05
    %v225 = vadd.f32 %v221, 1e-05
    %v226 = vadd.f32 %v222, 1e-05
    %v227 = vrsqrt.pop %v223
    %v228 = vmul.f32 %v227, %v223
    %v229 = vmul.f32 %v228, %v227
    %v230 = vmul.f32 0.5, %v229
    %v231 = vsub.f32 1.5, %v230
    %v232 = vmul.f32 %v227, %v231
    %vm233 = vweird.f32 %v223
    %vm234 = vweird.f32 %v227
    %vm235 = vmor %vm233, %vm234
    %v236 = vsel %vm235, %v227, %v232
    %v237 = vrsqrt.pop %v224
    %v238 = vmul.f32 %v237, %v224
    %v239 = vmul.f32 %v238, %v237
    %v240 = vmul.f32 0.5, %v239
    %v241 = vsub.f32 1.5, %v240
    %v242 = vmul.f32 %v237, %v241
    %vm243 = vweird.f32 %v224
    %vm244 = vweird.f32 %v237
    %vm245 = vmor %vm243, %vm244
    %v246 = vsel %vm245, %v237, %v242
    %v247 = vrsqrt.pop %v225
    %v248 = vmul.f32 %v247, %v225
    %v249 = vmul.f32 %v248, %v247
    %v250 = vmul.f32 0.5, %v249
    %v251 = vsub.f32 1.5, %v250
    %v252 = vmul.f32 %v247, %v251
    %vm253 = vweird.f32 %v225
    %vm254 = vweird.f32 %v247
    %vm255 = vmor %vm253, %vm254
    %v256 = vsel %vm255, %v247, %v252
    %v257 = vrsqrt.pop %v226
    %v258 = vmul.f32 %v257, %v226
    %v259 = vmul.f32 %v258, %v257
    %v260 = vmul.f32 0.5, %v259
    %v261 = vsub.f32 1.5, %v260
    %v262 = vmul.f32 %v257, %v261
    %vm263 = vweird.f32 %v226
    %vm264 = vweird.f32 %v257
    %vm265 = vmor %vm263, %vm264
    %v266 = vsel %vm265, %v257, %v262
    %v267 = vmul.f32 %v191, %v236
    %v268 = vmul.f32 %v192, %v236
    %v269 = vmul.f32 %v193, %v246
    %v270 = vmul.f32 %v194, %v246
    %v271 = vmul.f32 %v195, %v256
    %v272 = vmul.f32 %v196, %v256
    %v273 = vmul.f32 %v197, %v266
    %v274 = vmul.f32 %v198, %v266
    %s275 = scalar_lea.vmem [#allocation7], 1
    %v276 = vld [vmem:[%s275] ss:$4 sm:$0x3]
    %v278 = vperm.slane %v276, 0
    %v279 = vperm.slane %v276, 1
    %v282 = vmul.f32 %v267, %v278
    %v283 = vmul.f32 %v268, %v279
    %v284 = vmul.f32 %v269, %v278
    %v285 = vmul.f32 %v270, %v279
    %v286 = vmul.f32 %v271, %v278
    %v287 = vmul.f32 %v272, %v279
    %v288 = vmul.f32 %v273, %v278
    %v289 = vmul.f32 %v274, %v279
    %s290 = scalar_lea.vmem [#allocation7], 2
    %v291 = vld [vmem:[%s290] ss:$4 sm:$0x3]
    %v293 = vperm.slane %v291, 0
    %v294 = vperm.slane %v291, 1
    %v297 = vadd.f32 %v282, %v293
    %v298 = vadd.f32 %v283, %v294
    %v299 = vadd.f32 %v284, %v293
    %v300 = vadd.f32 %v285, %v294
    %v301 = vadd.f32 %v286, %v293
    %v302 = vadd.f32 %v287, %v294
    %v303 = vadd.f32 %v288, %v293
    %v304 = vadd.f32 %v289, %v294
    %305 = vst [vmem:[#allocation8] sm:$0xff] %v297
    %306 = vst [vmem:[#allocation8 + $0x8] sm:$0xff] %v298
    %307 = vst [vmem:[#allocation8 + $0x10] sm:$0xff] %v299
    %308 = vst [vmem:[#allocation8 + $0x18] sm:$0xff] %v300
    %309 = vst [vmem:[#allocation8 + $0x20] sm:$0xff] %v301
    %310 = vst [vmem:[#allocation8 + $0x28] sm:$0xff] %v302
    %311 = vst [vmem:[#allocation8 + $0x30] sm:$0xff] %v303
    %312 = vst [vmem:[#allocation8 + $0x38] sm:$0xff] %v304
    // Predicated region
    $region26: #{tpu_custom_call.1} parent=1 // pred_check
      _
    $region27: #{tpu_custom_call.1} parent=1 // pred_check_branch
      %314 = sbr.rel (0) target = $region29
    $region28: #{tpu_custom_call.1} parent=1 // pred_region
      %316 = vsyncadd [#allocation4], 0
      %s317 = sshll.u32 [#allocation8], 4
      %s318 = int_to_ptr.vmem [resolvable:$true] %s317
      %s319 = sshll.u32 %s3, 4
      %s320 = int_to_ptr.hbm [resolvable:$true] %s319
      %325 = dma.vmem_to_hbm [thread:$0]  %s318, 1024, %s320, [#allocation4], 256, 256, 16
    $region29: #{tpu_custom_call.1} parent=1 // pred_fallthru
      _
    // Predicated region
    $region30: #{tpu_custom_call.1} parent=1 // pred_check
      _
    $region31: #{tpu_custom_call.1} parent=1 // pred_check_branch
      %327 = sbr.rel (0) target = $region33
    $region32: #{tpu_custom_call.1} parent=1 // pred_region
      %329 = dma.done [#allocation4], 1024
    $region33: #{tpu_custom_call.1} parent=1 // pred_fallthru
      _
    %330 = vsyncpa [#allocation3], 1
    %331 = vsyncpa [#allocation6], 1
    %332 = vsyncpa [#allocation4], 1

</llo_original>
